<compile_context>
chip_gen: v7x
topology: tpu7x:2x2x1
jax: 0.10.0
libtpu: 0.0.40
codegen_flags: <defaults>
</compile_context>

<pallas_src>
import math
import functools

import jax
import jax.numpy as jnp
from jax import lax
from jax.experimental import pallas as pl
from jax.experimental.pallas import tpu as pltpu

LANE = 128  # lane-dense output width (>= action_size + 1)


def actor_critic_kernel(x_ref, w1_ref, b1_ref, wa2_ref, b2_ref, wc2_ref, out_ref,
                        *, num_actions):
    """Shapes (per grid step):
      x:(TB,S) f32   w1:(S,2H) bf16   b1:(1,2H) f32
      wa2:(H,LANE) bf16 (actor head, cols 0:A live)
      b2:(1,LANE) f32  (cols 0:A = actor bias, col A = critic bias bc2,
                        cols A+1: = -1e30 padding sentinel)
      wc2:(1,H) f32  (critic head row)      out:(TB,LANE) f32
    out columns 0:A hold softmax probs, column A holds the critic value,
    remaining columns are zero.
    """
    A = num_actions
    H = wc2_ref.shape[1]

    # Layer 1 (critic | actor fused): bf16 MXU operands, f32 accumulation.
    x = x_ref[...].astype(jnp.bfloat16)
    h = jnp.dot(x, w1_ref[...], preferred_element_type=jnp.float32) + b1_ref[...]
    h = jnp.maximum(h, 0.0)                                   # ReLU (f32, VPU)

    # Actor head: dense (TB,H) x (H,LANE) bf16 matmul -> f32 logits (cols 0:A).
    h_a = h[:, H:].astype(jnp.bfloat16)                       # lane-aligned slice
    logits = jnp.dot(h_a, wa2_ref[...], preferred_element_type=jnp.float32)

    # Critic head stays f32: lane-broadcast multiply + XLU reduce.
    value = jnp.sum(h[:, :H] * wc2_ref[...], axis=-1, keepdims=True)   # (TB,1)

    # Bias add: actor bias on logit cols, bc2 lands in col A, -1e30 in pad cols.
    z = logits + b2_ref[...]

    col = lax.broadcasted_iota(jnp.int32, z.shape, 1)
    is_val = col == A
    # Exclude the value column; padding columns already carry -1e30 via b2.
    masked = jnp.where(is_val, jnp.float32(-1e30), z)
    m = jnp.max(masked, axis=-1, keepdims=True)
    e = jnp.exp(masked - m)                                    # pads/value -> 0
    s = jnp.sum(e, axis=-1, keepdims=True)
    probs = e * pl.reciprocal(s)                               # exact: sums to 1

    # Recombine: probs in cols 0:A, value + bc2 (z[:,A]) in col A, zeros elsewhere.
    out_ref[...] = jnp.where(is_val, value + z, probs).astype(out_ref.dtype)


def fuse_params(params, num_actions, out_width=LANE):
    """Host-side, one-time fusion/packing of the 4 nn.Linear layers."""
    wc1, bc1 = params["wc1"], params["bc1"]     # (S,H), (1,H)
    wc2, bc2 = params["wc2"], params["bc2"]     # (H,1), (1,1)
    wa1, ba1 = params["wa1"], params["ba1"]     # (S,H), (1,H)
    wa2, ba2 = params["wa2"], params["ba2"]     # (H,A), (1,A)
    H = wc1.shape[1]
    A = num_actions
    assert out_width >= A + 1

    # Layer 1: critic|actor concatenated; weights cast to bf16 for the MXU.
    w1 = jnp.concatenate([wc1, wa1], axis=1).astype(jnp.bfloat16)   # (S, 2H)
    b1 = jnp.concatenate([bc1, ba1], axis=1).astype(jnp.float32)    # (1, 2H)

    # Actor head, lane-padded to LANE columns, bf16.
    wa2_pad = jnp.zeros((H, out_width), jnp.float32).at[:, :A].set(wa2)
    wa2_pad = wa2_pad.astype(jnp.bfloat16)                          # (H, LANE)

    # Fused second-layer bias: actor bias | critic bias | -1e30 padding mask.
    b2 = jnp.full((1, out_width), -1e30, jnp.float32)
    b2 = b2.at[0, :A].set(ba2[0])
    b2 = b2.at[0, A].set(bc2[0, 0])

    # Critic head kept f32 as a lane-dense row for VPU multiply + XLU reduce.
    wc2_row = wc2.reshape(1, H).astype(jnp.float32)                 # (1, H)
    return w1, b1, wa2_pad, b2, wc2_row


def actor_critic_forward(x, fused, num_actions, tb=128):
    """x: (B, S) f32. Returns (probs (B,A), value (B,1))."""
    w1, b1, wa2, b2, wc2_row = fused
    B, S = x.shape
    H2 = w1.shape[1]
    H = wc2_row.shape[1]
    P = wa2.shape[1]

    tb = min(tb, B)
    if B % tb != 0:          # keep tiles exact for the small demo shapes
        tb = B
    grid = (pl.cdiv(B, tb),)

    cost = pl.CostEstimate(
        flops=2 * B * S * H2 + 2 * B * H * P + 2 * B * H,
        transcendentals=B * P,
        bytes_accessed=(B * S * 4 + w1.size * 2 + b1.size * 4 + wa2.size * 2
                        + b2.size * 4 + wc2_row.size * 4 + B * P * 4),
    )

    out = pl.pallas_call(
        functools.partial(actor_critic_kernel, num_actions=num_actions),
        out_shape=jax.ShapeDtypeStruct((B, P), jnp.float32),
        grid=grid,
        in_specs=[
            pl.BlockSpec((tb, S), lambda i: (i, 0)),      # x: tiled over batch
            pl.BlockSpec((S, H2), lambda i: (0, 0)),      # weights: constant-index,
            pl.BlockSpec((1, H2), lambda i: (0, 0)),      # fetched once / resident
            pl.BlockSpec((H, P), lambda i: (0, 0)),
            pl.BlockSpec((1, P), lambda i: (0, 0)),
            pl.BlockSpec((1, H), lambda i: (0, 0)),
        ],
        out_specs=pl.BlockSpec((tb, P), lambda i: (i, 0)),
        compiler_params=pltpu.CompilerParams(
            dimension_semantics=("parallel",)),
        cost_estimate=cost,
    )(x, w1, b1, wa2, b2, wc2_row)

    probs = out[:, :num_actions]
    value = out[:, num_actions:num_actions + 1]
    return probs, value


def init_params(key, state_size, action_size, fc1_units):
    """PyTorch nn.Linear default init: uniform +/- 1/sqrt(fan_in).
    Weights stored as (in_features, out_features); biases as (1, out_features)."""
    def linear(k, fan_in, fan_out):
        kw, kb = jax.random.split(k)
        bound = 1.0 / math.sqrt(fan_in)
        w = jax.random.uniform(kw, (fan_in, fan_out), jnp.float32, -bound, bound)
        b = jax.random.uniform(kb, (1, fan_out), jnp.float32, -bound, bound)
        return w, b

    k1, k2, k3, k4 = jax.random.split(key, 4)
    wc1, bc1 = linear(k1, state_size, fc1_units)
    wc2, bc2 = linear(k2, fc1_units, 1)
    wa1, ba1 = linear(k3, state_size, fc1_units)
    wa2, ba2 = linear(k4, fc1_units, action_size)
    return dict(wc1=wc1, bc1=bc1, wc2=wc2, bc2=bc2,
                wa1=wa1, ba1=ba1, wa2=wa2, ba2=ba2)


if __name__ == "__main__":
    # Vectorized-env batch (raised per perf review so one weight fetch amortizes
    # over many rows and both v7x TensorCores get a tile), flat observations.
    B = 256          # number of parallel env states per forward
    STATE = 8        # envs.observation_space.shape[0]
    ACTIONS = 4      # envs.action_space.n
    FC1 = 256        # fc1_units

    key = jax.random.PRNGKey(0)
    kx, kp = jax.random.split(key)
    x = jax.random.normal(kx, (B, STATE), dtype=jnp.float32)
    params = init_params(kp, STATE, ACTIONS, FC1)
    fused = fuse_params(params, ACTIONS)

    probs, value = actor_critic_forward(x, fused, ACTIONS)
    probs, value = jax.block_until_ready(probs), jax.block_until_ready(value)

    # Reference check in plain JAX against the ORIGINAL (unfused, f32) weights.
    h_c = jnp.maximum(x @ params["wc1"] + params["bc1"], 0.0)
    value_ref = h_c @ params["wc2"] + params["bc2"]
    h_a = jnp.maximum(x @ params["wa1"] + params["ba1"], 0.0)
    logits = h_a @ params["wa2"] + params["ba2"]
    probs_ref = jax.nn.softmax(logits, axis=1)

    assert probs.shape == (B, ACTIONS) and value.shape == (B, 1)
    # bf16 MXU operands (f32 accumulation) -> tolerances loosened accordingly.
    assert jnp.allclose(value, value_ref, atol=2e-2, rtol=2e-2)
    assert jnp.allclose(probs, probs_ref, atol=1e-2, rtol=1e-2)
    # Exact reciprocal in the softmax -> probability rows sum to 1.
    assert jnp.allclose(jnp.sum(probs, axis=1), 1.0, atol=1e-4)
    # TODO(synk): torch.distributions.Categorical (sampling / log_prob) is
    # host-side glue; the kernel returns the probability matrix it wraps.
    print("KERNEL_OK")
</pallas_src>

<mosaic_0001>
module attributes {stable_mosaic.version = 11 : i64} {
  func.func @actor_critic_kernel(%arg0: i32, %arg1: memref<128x8xf32, #tpu.memory_space<vmem>>, %arg2: memref<8x512xbf16, #tpu.memory_space<vmem>>, %arg3: memref<1x512xf32, #tpu.memory_space<vmem>>, %arg4: memref<256x128xbf16, #tpu.memory_space<vmem>>, %arg5: memref<1x128xf32, #tpu.memory_space<vmem>>, %arg6: memref<1x256xf32, #tpu.memory_space<vmem>>, %arg7: memref<128x128xf32, #tpu.memory_space<vmem>>) attributes {dimension_semantics = [#tpu.dimension_semantics<parallel>], iteration_bounds = array<i64: 2>, scalar_prefetch = 0 : i64, scratch_operands = 0 : i64, tpu.core_type = #tpu.core_type<tc>, window_params = [{transform_indices = @transform_0, window_bounds = array<i64: 128, 8>}, {pipeline_mode = #tpu.pipeline_mode<synchronous>, transform_indices = @transform_1, window_bounds = array<i64: 8, 512>}, {pipeline_mode = #tpu.pipeline_mode<synchronous>, transform_indices = @transform_2, window_bounds = array<i64: 1, 512>}, {pipeline_mode = #tpu.pipeline_mode<synchronous>, transform_indices = @transform_3, window_bounds = array<i64: 256, 128>}, {pipeline_mode = #tpu.pipeline_mode<synchronous>, transform_indices = @transform_4, window_bounds = array<i64: 1, 128>}, {pipeline_mode = #tpu.pipeline_mode<synchronous>, transform_indices = @transform_5, window_bounds = array<i64: 1, 256>}, {transform_indices = @transform_6, window_bounds = array<i64: 128, 128>}]} {
    %c0 = arith.constant 0 : index
    %c0_0 = arith.constant 0 : index
    %0 = vector.load %arg1[%c0, %c0_0] : memref<128x8xf32, #tpu.memory_space<vmem>>, vector<128x8xf32>
    %1 = arith.truncf %0 : vector<128x8xf32> to vector<128x8xbf16>
    %c0_1 = arith.constant 0 : index
    %c0_2 = arith.constant 0 : index
    %2 = vector.load %arg2[%c0_1, %c0_2] : memref<8x512xbf16, #tpu.memory_space<vmem>>, vector<8x512xbf16>
    %cst = arith.constant dense<0.000000e+00> : vector<128x512xf32>
    %3 = tpu.matmul %1, %2, %cst {dimension_numbers = #tpu.dot_dimension_numbers<[1], [0], [0], [1], [0, 0, 1, 1], [], []>} : vector<128x8xbf16>, vector<8x512xbf16>, vector<128x512xf32> -> vector<128x512xf32>
    %c0_3 = arith.constant 0 : index
    %c0_4 = arith.constant 0 : index
    %4 = vector.load %arg3[%c0_3, %c0_4] : memref<1x512xf32, #tpu.memory_space<vmem>>, vector<1x512xf32>
    %5 = vector.broadcast %4 : vector<1x512xf32> to vector<128x512xf32>
    %6 = arith.addf %3, %5 : vector<128x512xf32>
    %cst_5 = arith.constant 0.000000e+00 : f32
    %7 = vector.broadcast %cst_5 : f32 to vector<128x512xf32>
    %8 = arith.maximumf %6, %7 : vector<128x512xf32>
    %9 = vector.extract_strided_slice %8 {offsets = [0, 256], sizes = [128, 256], strides = [1, 1]} : vector<128x512xf32> to vector<128x256xf32>
    %10 = arith.truncf %9 : vector<128x256xf32> to vector<128x256xbf16>
    %c0_6 = arith.constant 0 : index
    %c0_7 = arith.constant 0 : index
    %11 = vector.load %arg4[%c0_6, %c0_7] : memref<256x128xbf16, #tpu.memory_space<vmem>>, vector<256x128xbf16>
    %cst_8 = arith.constant dense<0.000000e+00> : vector<128x128xf32>
    %12 = tpu.matmul %10, %11, %cst_8 {dimension_numbers = #tpu.dot_dimension_numbers<[1], [0], [0], [1], [0, 0, 1, 1], [], []>} : vector<128x256xbf16>, vector<256x128xbf16>, vector<128x128xf32> -> vector<128x128xf32>
    %13 = vector.extract_strided_slice %8 {offsets = [0, 0], sizes = [128, 256], strides = [1, 1]} : vector<128x512xf32> to vector<128x256xf32>
    %c0_9 = arith.constant 0 : index
    %c0_10 = arith.constant 0 : index
    %14 = vector.load %arg6[%c0_9, %c0_10] : memref<1x256xf32, #tpu.memory_space<vmem>>, vector<1x256xf32>
    %15 = vector.broadcast %14 : vector<1x256xf32> to vector<128x256xf32>
    %16 = arith.mulf %13, %15 : vector<128x256xf32>
    %cst_11 = arith.constant dense<0.000000e+00> : vector<128xf32>
    %17 = vector.multi_reduction <add>, %16, %cst_11 [1] : vector<128x256xf32> to vector<128xf32>
    %18 = vector.shape_cast %17 : vector<128xf32> to vector<128x1xf32>
    %c0_12 = arith.constant 0 : index
    %c0_13 = arith.constant 0 : index
    %19 = vector.load %arg5[%c0_12, %c0_13] : memref<1x128xf32, #tpu.memory_space<vmem>>, vector<1x128xf32>
    %20 = vector.broadcast %19 : vector<1x128xf32> to vector<128x128xf32>
    %21 = arith.addf %12, %20 : vector<128x128xf32>
    %22 = tpu.iota {dimensions = array<i32: 1>} : vector<128x128xi32>
    %c4_i32 = arith.constant 4 : i32
    %23 = vector.broadcast %c4_i32 : i32 to vector<128x128xi32>
    %24 = arith.cmpi eq, %22, %23 : vector<128x128xi32>
    %cst_14 = arith.constant -1.000000e+30 : f32
    %25 = vector.broadcast %cst_14 : f32 to vector<128x128xf32>
    %26 = arith.select %24, %25, %21 : vector<128x128xi1>, vector<128x128xf32>
    %cst_15 = arith.constant dense<0xFF800000> : vector<128xf32>
    %27 = vector.multi_reduction <maximumf>, %26, %cst_15 [1] : vector<128x128xf32> to vector<128xf32>
    %28 = vector.shape_cast %27 : vector<128xf32> to vector<128x1xf32>
    %29 = vector.broadcast %28 : vector<128x1xf32> to vector<128x128xf32>
    %30 = arith.subf %26, %29 : vector<128x128xf32>
    %31 = math.exp %30 : vector<128x128xf32>
    %cst_16 = arith.constant dense<0.000000e+00> : vector<128xf32>
    %32 = vector.multi_reduction <add>, %31, %cst_16 [1] : vector<128x128xf32> to vector<128xf32>
    %33 = vector.shape_cast %32 : vector<128xf32> to vector<128x1xf32>
    %34 = tpu.reciprocal %33 : vector<128x1xf32> -> vector<128x1xf32>
    %35 = vector.broadcast %34 : vector<128x1xf32> to vector<128x128xf32>
    %36 = arith.mulf %31, %35 : vector<128x128xf32>
    %37 = vector.broadcast %18 : vector<128x1xf32> to vector<128x128xf32>
    %38 = arith.addf %37, %21 : vector<128x128xf32>
    %39 = arith.select %24, %38, %36 : vector<128x128xi1>, vector<128x128xf32>
    %c0_17 = arith.constant 0 : index
    %c0_18 = arith.constant 0 : index
    %40 = vector.load %arg7[%c0_17, %c0_18] : memref<128x128xf32, #tpu.memory_space<vmem>>, vector<128x128xf32>
    tpu.vector_store %arg7[%c0_17, %c0_18], %39 {strides = array<i32>} : memref<128x128xf32, #tpu.memory_space<vmem>>, vector<128x128xf32>,
    return
  }
  func.func @transform_0(%arg0: i32) -> (i32, i32) {
    %c0_i32 = arith.constant 0 : i32
    %c0_i32_0 = arith.constant 0 : i32
    return %arg0, %c0_i32 : i32, i32
  }
  func.func @transform_1(%arg0: i32) -> (i32, i32) {
    %c0_i32 = arith.constant 0 : i32
    %c0_i32_0 = arith.constant 0 : i32
    %c0_i32_1 = arith.constant 0 : i32
    return %c0_i32, %c0_i32_0 : i32, i32
  }
  func.func @transform_2(%arg0: i32) -> (i32, i32) {
    %c0_i32 = arith.constant 0 : i32
    %c0_i32_0 = arith.constant 0 : i32
    %c0_i32_1 = arith.constant 0 : i32
    return %c0_i32, %c0_i32_0 : i32, i32
  }
  func.func @transform_3(%arg0: i32) -> (i32, i32) {
    %c0_i32 = arith.constant 0 : i32
    %c0_i32_0 = arith.constant 0 : i32
    %c0_i32_1 = arith.constant 0 : i32
    return %c0_i32, %c0_i32_0 : i32, i32
  }
  func.func @transform_4(%arg0: i32) -> (i32, i32) {
    %c0_i32 = arith.constant 0 : i32
    %c0_i32_0 = arith.constant 0 : i32
    %c0_i32_1 = arith.constant 0 : i32
    return %c0_i32, %c0_i32_0 : i32, i32
  }
  func.func @transform_5(%arg0: i32) -> (i32, i32) {
    %c0_i32 = arith.constant 0 : i32
    %c0_i32_0 = arith.constant 0 : i32
    %c0_i32_1 = arith.constant 0 : i32
    return %c0_i32, %c0_i32_0 : i32, i32
  }
  func.func @transform_6(%arg0: i32) -> (i32, i32) {
    %c0_i32 = arith.constant 0 : i32
    %c0_i32_0 = arith.constant 0 : i32
    return %arg0, %c0_i32 : i32, i32
  }
}

</mosaic_0001>

<llo_original>
// kernel: tpu_custom_call.1
$region0: #{tpu_custom_call.1}
  #allocation0 [shape = 'u32[]', space=smem, size = 0x4, offset = 0x4, fixed_abs, tag = 'smem constant byte address 0x4 - core index']
  #allocation1 [shape = 'u32[144,128]{1,0:T(1,128)}', space=vmem, size = 0x12000, scoped, tag = 'internal scratch']
  %s0 = inlined_call_operand.vmem [shape: f32[256,8], index: 0, kind: input, shape index: {}]
  %s1 = inlined_call_operand.vmem [shape: bf16[8,512], index: 1, kind: input, shape index: {}]
  %s2 = inlined_call_operand.vmem [shape: f32[1,512], index: 2, kind: input, shape index: {}]
  %s3 = inlined_call_operand.vmem [shape: bf16[256,128], index: 3, kind: input, shape index: {}]
  %s4 = inlined_call_operand.vmem [shape: f32[1,128], index: 4, kind: input, shape index: {}]
  %s5 = inlined_call_operand.vmem [shape: f32[1,256], index: 5, kind: input, shape index: {}]
  %s6 = inlined_call_operand.hbm [shape: f32[256,128], index: 6, kind: output, shape index: {}]
  %s7 = sld [smem:[#allocation0]]
  $region57: #{tpu_custom_call.1} parent=0
    _
  %s9 = ssub.s32 1, %s7
  %s10 = scalar_select 0, %s9, %s7
  $region1: #{tpu_custom_call.1} parent=0
    #allocation2 [shape = 'u8[131072]{0}', space=vmem, size = 0x20000, scoped, tag = 'output window, operand 0']
    #allocation3 [shape = 's32[2]{0}', space=sflag, size = 0x8, scoped, tag = 'scoped memory for tpu_custom_call.1']
    %11 = vsyncpa [#allocation3], 0
    %s12 = scalar_lea.sflag [#allocation3], 1
    %13 = vsyncpa %s12, 0
    loop: start=0, step=1, limit=4
    $region2: #{tpu_custom_call.1} parent=1 // loop_pre_header
      _
    $region3: #{tpu_custom_call.1} parent=1 // loop_header
      %s15 = sphi 0, %s19
      %p16 = scmp.ge.s32.totalorder %s15, 4
      %s25 = sphi 0, %s27
      %s28 = sphi 0, %s25
      %s29 = sphi 0, %s28
      %s45 = sphi 0, %s29
      %s49 = sphi 0, %s49
      %s51 = sphi 0, %s49
      %s52 = sphi 0, %s51
      %s66 = sphi 0, %s52
      %s70 = sphi 0, %s70
      %s72 = sphi 0, %s70
      %s73 = sphi 0, %s72
      %s87 = sphi 0, %s73
      %s91 = sphi 0, %s91
      %s93 = sphi 0, %s91
      %s94 = sphi 0, %s93
      %s108 = sphi 0, %s94
      %s112 = sphi 0, %s112
      %s114 = sphi 0, %s112
      %s115 = sphi 0, %s114
      %s129 = sphi 0, %s115
      %s133 = sphi 0, %s133
      %s135 = sphi 0, %s133
      %s136 = sphi 0, %s135
      %s150 = sphi 0, %s136
      %s156 = sphi 0, %s158
      %s159 = sphi 0, %s156
      %s160 = sphi 0, %s159
      %s176 = sphi 0, %s160
    $region4: #{tpu_custom_call.1} parent=1 // loop_header_branch
      %18 = sbr.rel (%p16) target = $region8
    $region5: #{tpu_custom_call.1} parent=1 // loop_body
      %s20 = ssub.s32 %s15, 1
      %s21 = ssub.s32 %s15, 2
      %s22 = sadd.s32 %s15, 1
      %s23 = ssub.s32 %s15, %s22
      %p24 = scmp.eq.s32.totalorder %s23, 0
      %s26 = sadd.s32 %s25, 1
      %s27 = scalar_select %p24, %s25, %s26
      %p30 = pneg %p24
      %p31 = scmp.eq.s32.totalorder %s15, 1
      %p32 = por %p30, %p31
      %p33 = scmp.ne.s32.totalorder %s25, %s28
      %p34 = scmp.eq.s32.totalorder %s15, 0
      %p35 = por %p33, %p34
      %p36 = scmp.ne.s32.totalorder %s25, %s28
      %p37 = scmp.eq.s32.totalorder %s20, 1
      %p38 = por %p36, %p37
      %p39 = scmp.ne.s32.totalorder %s28, %s29
      %p40 = scmp.eq.s32.totalorder %s20, 0
      %p41 = por %p39, %p40
      %p42 = scmp.ne.s32.totalorder %s28, %s29
      %p43 = scmp.eq.s32.totalorder %s21, 1
      %p44 = por %p42, %p43
      %p46 = scmp.ne.s32.totalorder %s29, %s45
      %p47 = scmp.eq.s32.totalorder %s21, 0
      %p48 = por %p46, %p47
      %s50 = sadd.s32 %s49, 1
      %p53 = scmp.eq.s32.totalorder %s15, 1
      %p54 = scmp.ne.s32.totalorder %s49, %s51
      %p55 = scmp.eq.s32.totalorder %s15, 0
      %p56 = por %p54, %p55
      %p57 = scmp.ne.s32.totalorder %s49, %s51
      %p58 = scmp.eq.s32.totalorder %s20, 1
      %p59 = por %p57, %p58
      %p60 = scmp.ne.s32.totalorder %s51, %s52
      %p61 = scmp.eq.s32.totalorder %s20, 0
      %p62 = por %p60, %p61
      %p63 = scmp.ne.s32.totalorder %s51, %s52
      %p64 = scmp.eq.s32.totalorder %s21, 1
      %p65 = por %p63, %p64
      %p67 = scmp.ne.s32.totalorder %s52, %s66
      %p68 = scmp.eq.s32.totalorder %s21, 0
      %p69 = por %p67, %p68
      %s71 = sadd.s32 %s70, 1
      %p74 = scmp.eq.s32.totalorder %s15, 1
      %p75 = scmp.ne.s32.totalorder %s70, %s72
      %p76 = scmp.eq.s32.totalorder %s15, 0
      %p77 = por %p75, %p76
      %p78 = scmp.ne.s32.totalorder %s70, %s72
      %p79 = scmp.eq.s32.totalorder %s20, 1
      %p80 = por %p78, %p79
      %p81 = scmp.ne.s32.totalorder %s72, %s73
      %p82 = scmp.eq.s32.totalorder %s20, 0
      %p83 = por %p81, %p82
      %p84 = scmp.ne.s32.totalorder %s72, %s73
      %p85 = scmp.eq.s32.totalorder %s21, 1
      %p86 = por %p84, %p85
      %p88 = scmp.ne.s32.totalorder %s73, %s87
      %p89 = scmp.eq.s32.totalorder %s21, 0
      %p90 = por %p88, %p89
      %s92 = sadd.s32 %s91, 1
      %p95 = scmp.eq.s32.totalorder %s15, 1
      %p96 = scmp.ne.s32.totalorder %s91, %s93
      %p97 = scmp.eq.s32.totalorder %s15, 0
      %p98 = por %p96, %p97
      %p99 = scmp.ne.s32.totalorder %s91, %s93
      %p100 = scmp.eq.s32.totalorder %s20, 1
      %p101 = por %p99, %p100
      %p102 = scmp.ne.s32.totalorder %s93, %s94
      %p103 = scmp.eq.s32.totalorder %s20, 0
      %p104 = por %p102, %p103
      %p105 = scmp.ne.s32.totalorder %s93, %s94
      %p106 = scmp.eq.s32.totalorder %s21, 1
      %p107 = por %p105, %p106
      %p109 = scmp.ne.s32.totalorder %s94, %s108
      %p110 = scmp.eq.s32.totalorder %s21, 0
      %p111 = por %p109, %p110
      %s113 = sadd.s32 %s112, 1
      %p116 = scmp.eq.s32.totalorder %s15, 1
      %p117 = scmp.ne.s32.totalorder %s112, %s114
      %p118 = scmp.eq.s32.totalorder %s15, 0
      %p119 = por %p117, %p118
      %p120 = scmp.ne.s32.totalorder %s112, %s114
      %p121 = scmp.eq.s32.totalorder %s20, 1
      %p122 = por %p120, %p121
      %p123 = scmp.ne.s32.totalorder %s114, %s115
      %p124 = scmp.eq.s32.totalorder %s20, 0
      %p125 = por %p123, %p124
      %p126 = scmp.ne.s32.totalorder %s114, %s115
      %p127 = scmp.eq.s32.totalorder %s21, 1
      %p128 = por %p126, %p127
      %p130 = scmp.ne.s32.totalorder %s115, %s129
      %p131 = scmp.eq.s32.totalorder %s21, 0
      %p132 = por %p130, %p131
      %s134 = sadd.s32 %s133, 1
      %p137 = scmp.eq.s32.totalorder %s15, 1
      %p138 = scmp.ne.s32.totalorder %s133, %s135
      %p139 = scmp.eq.s32.totalorder %s15, 0
      %p140 = por %p138, %p139
      %p141 = scmp.ne.s32.totalorder %s133, %s135
      %p142 = scmp.eq.s32.totalorder %s20, 1
      %p143 = por %p141, %p142
      %p144 = scmp.ne.s32.totalorder %s135, %s136
      %p145 = scmp.eq.s32.totalorder %s20, 0
      %p146 = por %p144, %p145
      %p147 = scmp.ne.s32.totalorder %s135, %s136
      %p148 = scmp.eq.s32.totalorder %s21, 1
      %p149 = por %p147, %p148
      %p151 = scmp.ne.s32.totalorder %s136, %s150
      %p152 = scmp.eq.s32.totalorder %s21, 0
      %p153 = por %p151, %p152
      %s154 = ssub.s32 %s15, %s22
      %p155 = scmp.eq.s32.totalorder %s154, 0
      %s157 = sadd.s32 %s156, 1
      %s158 = scalar_select %p155, %s156, %s157
      %p161 = pneg %p155
      %p162 = scmp.eq.s32.totalorder %s15, 1
      %p163 = por %p161, %p162
      %p164 = scmp.ne.s32.totalorder %s156, %s159
      %p165 = scmp.eq.s32.totalorder %s15, 0
      %p166 = por %p164, %p165
      %p167 = scmp.ne.s32.totalorder %s156, %s159
      %p168 = scmp.eq.s32.totalorder %s20, 1
      %p169 = por %p167, %p168
      %p170 = scmp.ne.s32.totalorder %s159, %s160
      %p171 = scmp.eq.s32.totalorder %s20, 0
      %p172 = por %p170, %p171
      %p173 = scmp.ne.s32.totalorder %s159, %s160
      %p174 = scmp.eq.s32.totalorder %s21, 1
      %p175 = por %p173, %p174
      %p177 = scmp.ne.s32.totalorder %s160, %s176
      %p178 = scmp.eq.s32.totalorder %s21, 0
      %p179 = por %p177, %p178
      %p180 = scmp.le.s32.totalorder 1, %s15
      %p181 = scmp.lt.s32.totalorder %s15, 3
      %p182 = pnand %p180, %p181
      %p183 = pneg %p182
      // Predicated region
      $region9: #{tpu_custom_call.1} parent=5 // pred_check
        _
      $region10: #{tpu_custom_call.1} parent=5 // pred_check_branch
        %185 = sbr.rel (%p182) target = $region12
      $region11: #{tpu_custom_call.1} parent=5 // pred_region
        %s186 = ssub.s32 %s15, 1
        // Predicated region
        $region13: #{tpu_custom_call.1} parent=11 // pred_check
          %p187 = pneg %p62
        $region14: #{tpu_custom_call.1} parent=11 // pred_check_branch
          %189 = sbr.rel (%p187) target = $region16
        $region15: #{tpu_custom_call.1} parent=11 // pred_region
          _
        $region16: #{tpu_custom_call.1} parent=11 // pred_fallthru
          _
        // Predicated region
        $region17: #{tpu_custom_call.1} parent=11 // pred_check
          %p190 = pneg %p83
        $region18: #{tpu_custom_call.1} parent=11 // pred_check_branch
          %192 = sbr.rel (%p190) target = $region20
        $region19: #{tpu_custom_call.1} parent=11 // pred_region
          _
        $region20: #{tpu_custom_call.1} parent=11 // pred_fallthru
          _
        // Predicated region
        $region21: #{tpu_custom_call.1} parent=11 // pred_check
          %p193 = pneg %p104
        $region22: #{tpu_custom_call.1} parent=11 // pred_check_branch
          %195 = sbr.rel (%p193) target = $region24
        $region23: #{tpu_custom_call.1} parent=11 // pred_region
          _
        $region24: #{tpu_custom_call.1} parent=11 // pred_fallthru
          _
        // Predicated region
        $region25: #{tpu_custom_call.1} parent=11 // pred_check
          %p196 = pneg %p125
        $region26: #{tpu_custom_call.1} parent=11 // pred_check_branch
          %198 = sbr.rel (%p196) target = $region28
        $region27: #{tpu_custom_call.1} parent=11 // pred_region
          _
        $region28: #{tpu_custom_call.1} parent=11 // pred_fallthru
          _
        // Predicated region
        $region29: #{tpu_custom_call.1} parent=11 // pred_check
          %p199 = pneg %p146
        $region30: #{tpu_custom_call.1} parent=11 // pred_check_branch
          %201 = sbr.rel (%p199) target = $region32
        $region31: #{tpu_custom_call.1} parent=11 // pred_region
          _
        $region32: #{tpu_custom_call.1} parent=11 // pred_fallthru
          _
      $region12: #{tpu_custom_call.1} parent=5 // pred_fallthru
        _
      %p202 = scmp.lt.s32.totalorder %s15, 2
      // Predicated region
      $region33: #{tpu_custom_call.1} parent=5 // pred_check
        %p203 = pneg %p202
      $region34: #{tpu_custom_call.1} parent=5 // pred_check_branch
        %205 = sbr.rel (%p203) target = $region36
      $region35: #{tpu_custom_call.1} parent=5 // pred_region
        // Predicated region
        $region37: #{tpu_custom_call.1} parent=35 // pred_check
          %p206 = pneg %p35
        $region38: #{tpu_custom_call.1} parent=35 // pred_check_branch
          %208 = sbr.rel (%p206) target = $region40
        $region39: #{tpu_custom_call.1} parent=35 // pred_region
          %s209 = smul.u32 16, %s15
          %p210 = scmp.lt.s32.totalorder %s209, 31
          %s211 = scalar_select %p210, %s209, 31
          %s212 = smul.addr %s211, 8
          %s213 = scalar_lea.vmem %s0, %s212
          %s214 = smul.u32 16, %s15
        $region40: #{tpu_custom_call.1} parent=35 // pred_fallthru
          _
      $region36: #{tpu_custom_call.1} parent=5 // pred_fallthru
        _
      %p215 = scmp.le.s32.totalorder 1, %s15
      %p216 = scmp.lt.s32.totalorder %s15, 3
      %p217 = pnand %p215, %p216
      %p218 = pneg %p217
      // Predicated region
      $region41: #{tpu_custom_call.1} parent=5 // pred_check
        _
      $region42: #{tpu_custom_call.1} parent=5 // pred_check_branch
        %220 = sbr.rel (%p217) target = $region44
      $region43: #{tpu_custom_call.1} parent=5 // pred_region
        %s221 = ssub.s32 %s15, 1
        %s222 = smul.u32 16, %s20
        %p223 = scmp.lt.s32.totalorder %s222, 31
        %s224 = scalar_select %p223, %s222, 31
        %s225 = smul.addr %s224, 8
        %s226 = scalar_lea.vmem %s0, %s225
        %p227 = pneg %p41
        %p228 = pneg %p38
        %p229 = pneg %p62
        %p230 = pneg %p59
        %p231 = pneg %p83
        %p232 = pneg %p80
        %p233 = pneg %p104
        %p234 = pneg %p101
        %p235 = pneg %p125
        %p236 = pneg %p122
        %p237 = pneg %p146
        %p238 = pneg %p143
        %p239 = pneg %p172
        %p240 = pneg %p169
        %s241 = sand.u32 %s159, 1
        %s242 = scalar_lea.sflag [#allocation3], %s241
        %s243 = sand.u32 %s159, 1
        %s244 = smul.addr %s243, 128
        %s245 = scalar_lea.vmem [#allocation2], %s244
        %s246 = smul.u32 16, %s20
        %p247 = scmp.lt.s32.totalorder %s246, 31
        %s248 = scalar_select %p247, %s246, 31
        %s249 = smul.addr %s248, 8
        %s250 = scalar_lea.vmem %s0, %s249
        %s251 = smul.u32 16, %s20
        %s252 = smul.u32 16, %s20
        %v254 = vld [vmem:[%s250] sm:$0xff]
        %v255 = vld [vmem:[%s250 + $0x8] sm:$0xff]
        %v256 = vld [vmem:[%s250 + $0x10] sm:$0xff]
        %v257 = vld [vmem:[%s250 + $0x18] sm:$0xff]
        %v258 = vld [vmem:[%s250 + $0x20] sm:$0xff]
        %v259 = vld [vmem:[%s250 + $0x28] sm:$0xff]
        %v260 = vld [vmem:[%s250 + $0x30] sm:$0xff]
        %v261 = vld [vmem:[%s250 + $0x38] sm:$0xff]
        %v262 = vld [vmem:[%s250 + $0x40] sm:$0xff]
        %v263 = vld [vmem:[%s250 + $0x48] sm:$0xff]
        %v264 = vld [vmem:[%s250 + $0x50] sm:$0xff]
        %v265 = vld [vmem:[%s250 + $0x58] sm:$0xff]
        %v266 = vld [vmem:[%s250 + $0x60] sm:$0xff]
        %v267 = vld [vmem:[%s250 + $0x68] sm:$0xff]
        %v268 = vld [vmem:[%s250 + $0x70] sm:$0xff]
        %v269 = vld [vmem:[%s250 + $0x78] sm:$0xff]
        %v270 = vpack.c.bf16 %v255, %v254
        %v271 = vpack.c.bf16 %v257, %v256
        %v272 = vpack.c.bf16 %v259, %v258
        %v273 = vpack.c.bf16 %v261, %v260
        %v274 = vpack.c.bf16 %v263, %v262
        %v275 = vpack.c.bf16 %v265, %v264
        %v276 = vpack.c.bf16 %v267, %v266
        %v277 = vpack.c.bf16 %v269, %v268
        %v278 = vld [vmem:[%s1] sm:$0xff]
        %v279 = vld [vmem:[%s1 + $0x8] sm:$0xff]
        %v280 = vld [vmem:[%s2] sm:$0xf]
        %v282 = vlaneseq
        %v283 = vshrl.u32 %v282, 7
        %v284 = vsub.s32 0, %v283
        %v285 = vrot.slane %v280, %v284
        %v286 = vlaneseq
        %v287 = vshrl.u32 %v286, 7
        %v288 = vsub.s32 1, %v287
        %v289 = vrot.slane %v280, %v288
        %v290 = vlaneseq
        %v291 = vshrl.u32 %v290, 7
        %v292 = vsub.s32 2, %v291
        %v293 = vrot.slane %v280, %v292
        %v294 = vlaneseq
        %v295 = vshrl.u32 %v294, 7
        %v296 = vsub.s32 3, %v295
        %v297 = vrot.slane %v280, %v296
        %v304 = vunpack.c.l.b16 %v278
        %v305 = vunpack.c.h.b16 %v278
        %v306 = vunpack.c.l.b16 %v279
        %v307 = vunpack.c.h.b16 %v279
        %v308 = vpack.c.b16 %v304, %v304
        %v309 = vpack.c.b16 %v305, %v305
        %v310 = vpack.c.b16 %v306, %v306
        %v311 = vpack.c.b16 %v307, %v307
        %vm312 = vcmask 64512
        %v314 = vsel %vm312, %v270, 0
        %v317 = vsel %vm312, %v271, 0
        %v320 = vsel %vm312, %v272, 0
        %v323 = vsel %vm312, %v273, 0
        %v326 = vsel %vm312, %v274, 0
        %v329 = vsel %vm312, %v275, 0
        %v332 = vsel %vm312, %v276, 0
        %v335 = vsel %vm312, %v277, 0
        %vm337 = vcmask 1043456
        %v339 = vsel %vm337, %v308, 0
        %v342 = vsel %vm337, %v309, 0
        %v345 = vsel %vm337, %v310, 0
        %v348 = vsel %vm337, %v311, 0
        %350 = vmatprep.subr.bf16.mxu0 %v342
        %351 = vmatpush1.bf16.msra.mxu0 %v339
        %352 = vmatprep.subr.bf16.mxu0 0
        %353 = vmatpush1.bf16.msra.mxu0 0
        %354 = vmatprep.subr.bf16.mxu0 0
        %355 = vmatpush1.bf16.msra.mxu0 0
        %356 = vmatprep.subr.bf16.mxu0 0
        %357 = vmatpush1.bf16.msra.mxu0 0
        %358 = vmatprep.subr.bf16.mxu0 0
        %359 = vmatpush1.bf16.msra.mxu0 0
        %360 = vmatprep.subr.bf16.mxu0 0
        %361 = vmatpush1.bf16.msra.mxu0 0
        %362 = vmatprep.subr.bf16.mxu0 0
        %363 = vmatpush1.bf16.msra.mxu0 0
        %364 = vmatprep.subr.bf16.mxu0 0
        %365 = vmatpush1.bf16.msra.mxu0 0
        %366 = vmatprep.subr.bf16.mxu0 0
        %367 = vmatpush1.bf16.msra.mxu0 0
        %368 = vmatprep.subr.bf16.mxu0 0
        %369 = vmatpush1.bf16.msra.mxu0 0
        %370 = vmatprep.subr.bf16.mxu0 0
        %371 = vmatpush1.bf16.msra.mxu0 0
        %372 = vmatprep.subr.bf16.mxu0 0
        %373 = vmatpush1.bf16.msra.mxu0 0
        %374 = vmatprep.subr.bf16.mxu0 0
        %375 = vmatpush1.bf16.msra.mxu0 0
        %376 = vmatprep.subr.bf16.mxu0 0
        %377 = vmatpush1.bf16.msra.mxu0 0
        %378 = vmatprep.subr.bf16.mxu0 0
        %379 = vmatpush1.bf16.msra.mxu0 0
        %380 = vmatprep.subr.bf16.mxu0 0
        %381 = vmatpush1.bf16.msra.mxu0 0
        %382 = vmatprep.mubr.bf16.mxu0 0
        %383 = vmatmul.mubr.bf16.gmra.mrb[0].mxu0 %v314
        %v384 = vpop.f32.mrb[0].mxu0
        %v385 = vadd.f32 %v285, %v384
        %v386 = vpop.f32.mrb[0].mxu0
        %v387 = vadd.f32 %v289, %v386
        %v388 = vpop.f32.mrb[0].mxu0
        %v389 = vadd.f32 %v285, %v388
        %v390 = vpop.f32.mrb[0].mxu0
        %v391 = vadd.f32 %v289, %v390
        %392 = vmatprep.mubr.bf16.mxu0 0
        %393 = vmatmul.mubr.bf16.gmra.mrb[0].mxu0 %v317
        %v394 = vpop.f32.mrb[0].mxu0
        %v395 = vadd.f32 %v285, %v394
        %v396 = vpop.f32.mrb[0].mxu0
        %v397 = vadd.f32 %v289, %v396
        %v398 = vpop.f32.mrb[0].mxu0
        %v399 = vadd.f32 %v285, %v398
        %v400 = vpop.f32.mrb[0].mxu0
        %v401 = vadd.f32 %v289, %v400
        %402 = vmatprep.mubr.bf16.mxu0 0
        %403 = vmatmul.mubr.bf16.gmra.mrb[0].mxu0 %v320
        %v404 = vpop.f32.mrb[0].mxu0
        %v405 = vadd.f32 %v285, %v404
        %v406 = vpop.f32.mrb[0].mxu0
        %v407 = vadd.f32 %v289, %v406
        %v408 = vpop.f32.mrb[0].mxu0
        %v409 = vadd.f32 %v285, %v408
        %v410 = vpop.f32.mrb[0].mxu0
        %v411 = vadd.f32 %v289, %v410
        %412 = vmatprep.mubr.bf16.mxu0 0
        %413 = vmatmul.mubr.bf16.gmra.mrb[0].mxu0 %v323
        %v414 = vpop.f32.mrb[0].mxu0
        %v415 = vadd.f32 %v285, %v414
        %v416 = vpop.f32.mrb[0].mxu0
        %v417 = vadd.f32 %v289, %v416
        %v418 = vpop.f32.mrb[0].mxu0
        %v419 = vadd.f32 %v285, %v418
        %v420 = vpop.f32.mrb[0].mxu0
        %v421 = vadd.f32 %v289, %v420
        %422 = vmatprep.mubr.bf16.mxu0 0
        %423 = vmatmul.mubr.bf16.gmra.mrb[0].mxu0 %v326
        %v424 = vpop.f32.mrb[0].mxu0
        %v425 = vadd.f32 %v285, %v424
        %v426 = vpop.f32.mrb[0].mxu0
        %v427 = vadd.f32 %v289, %v426
        %v428 = vpop.f32.mrb[0].mxu0
        %v429 = vadd.f32 %v285, %v428
        %v430 = vpop.f32.mrb[0].mxu0
        %v431 = vadd.f32 %v289, %v430
        %432 = vmatprep.mubr.bf16.mxu0 0
        %433 = vmatmul.mubr.bf16.gmra.mrb[0].mxu0 %v329
        %v434 = vpop.f32.mrb[0].mxu0
        %v435 = vadd.f32 %v285, %v434
        %v436 = vpop.f32.mrb[0].mxu0
        %v437 = vadd.f32 %v289, %v436
        %v438 = vpop.f32.mrb[0].mxu0
        %v439 = vadd.f32 %v285, %v438
        %v440 = vpop.f32.mrb[0].mxu0
        %v441 = vadd.f32 %v289, %v440
        %442 = vmatprep.mubr.bf16.mxu0 0
        %443 = vmatmul.mubr.bf16.gmra.mrb[0].mxu0 %v332
        %v444 = vpop.f32.mrb[0].mxu0
        %v445 = vadd.f32 %v285, %v444
        %v446 = vpop.f32.mrb[0].mxu0
        %v447 = vadd.f32 %v289, %v446
        %v448 = vpop.f32.mrb[0].mxu0
        %v449 = vadd.f32 %v285, %v448
        %v450 = vpop.f32.mrb[0].mxu0
        %v451 = vadd.f32 %v289, %v450
        %452 = vmatprep.mubr.bf16.mxu0 0
        %453 = vmatmul.mubr.bf16.gmra.mrb[0].mxu0 %v335
        %v454 = vpop.f32.mrb[0].mxu0
        %v455 = vadd.f32 %v285, %v454
        %v456 = vpop.f32.mrb[0].mxu0
        %v457 = vadd.f32 %v289, %v456
        %v458 = vpop.f32.mrb[0].mxu0
        %v459 = vadd.f32 %v285, %v458
        %v460 = vpop.f32.mrb[0].mxu0
        %v461 = vadd.f32 %v289, %v460
        %462 = vdwg.mxu0
        %463 = vmatprep.subr.bf16.mxu0 %v348
        %464 = vmatpush1.bf16.msra.mxu0 %v345
        %465 = vmatprep.subr.bf16.mxu0 0
        %466 = vmatpush1.bf16.msra.mxu0 0
        %467 = vmatprep.subr.bf16.mxu0 0
        %468 = vmatpush1.bf16.msra.mxu0 0
        %469 = vmatprep.subr.bf16.mxu0 0
        %470 = vmatpush1.bf16.msra.mxu0 0
        %471 = vmatprep.subr.bf16.mxu0 0
        %472 = vmatpush1.bf16.msra.mxu0 0
        %473 = vmatprep.subr.bf16.mxu0 0
        %474 = vmatpush1.bf16.msra.mxu0 0
        %475 = vmatprep.subr.bf16.mxu0 0
        %476 = vmatpush1.bf16.msra.mxu0 0
        %477 = vmatprep.subr.bf16.mxu0 0
        %478 = vmatpush1.bf16.msra.mxu0 0
        %479 = vmatprep.subr.bf16.mxu0 0
        %480 = vmatpush1.bf16.msra.mxu0 0
        %481 = vmatprep.subr.bf16.mxu0 0
        %482 = vmatpush1.bf16.msra.mxu0 0
        %483 = vmatprep.subr.bf16.mxu0 0
        %484 = vmatpush1.bf16.msra.mxu0 0
        %485 = vmatprep.subr.bf16.mxu0 0
        %486 = vmatpush1.bf16.msra.mxu0 0
        %487 = vmatprep.subr.bf16.mxu0 0
        %488 = vmatpush1.bf16.msra.mxu0 0
        %489 = vmatprep.subr.bf16.mxu0 0
        %490 = vmatpush1.bf16.msra.mxu0 0
        %491 = vmatprep.subr.bf16.mxu0 0
        %492 = vmatpush1.bf16.msra.mxu0 0
        %493 = vmatprep.subr.bf16.mxu0 0
        %494 = vmatpush1.bf16.msra.mxu0 0
        %495 = vmatprep.mubr.bf16.mxu0 0
        %496 = vmatmul.mubr.bf16.gmra.mrb[0].mxu0 %v314
        %v497 = vpop.f32.mrb[0].mxu0
        %v498 = vadd.f32 %v293, %v497
        %v499 = vpop.f32.mrb[0].mxu0
        %v500 = vadd.f32 %v297, %v499
        %v501 = vpop.f32.mrb[0].mxu0
        %v502 = vadd.f32 %v293, %v501
        %v503 = vpop.f32.mrb[0].mxu0
        %v504 = vadd.f32 %v297, %v503
        %505 = vmatprep.mubr.bf16.mxu0 0
        %506 = vmatmul.mubr.bf16.gmra.mrb[0].mxu0 %v317
        %v507 = vpop.f32.mrb[0].mxu0
        %v508 = vadd.f32 %v293, %v507
        %v509 = vpop.f32.mrb[0].mxu0
        %v510 = vadd.f32 %v297, %v509
        %v511 = vpop.f32.mrb[0].mxu0
        %v512 = vadd.f32 %v293, %v511
        %v513 = vpop.f32.mrb[0].mxu0
        %v514 = vadd.f32 %v297, %v513
        %515 = vmatprep.mubr.bf16.mxu0 0
        %516 = vmatmul.mubr.bf16.gmra.mrb[0].mxu0 %v320
        %v517 = vpop.f32.mrb[0].mxu0
        %v518 = vadd.f32 %v293, %v517
        %v519 = vpop.f32.mrb[0].mxu0
        %v520 = vadd.f32 %v297, %v519
        %v521 = vpop.f32.mrb[0].mxu0
        %v522 = vadd.f32 %v293, %v521
        %v523 = vpop.f32.mrb[0].mxu0
        %v524 = vadd.f32 %v297, %v523
        %525 = vmatprep.mubr.bf16.mxu0 0
        %526 = vmatmul.mubr.bf16.gmra.mrb[0].mxu0 %v323
        %v527 = vpop.f32.mrb[0].mxu0
        %v528 = vadd.f32 %v293, %v527
        %v529 = vpop.f32.mrb[0].mxu0
        %v530 = vadd.f32 %v297, %v529
        %v531 = vpop.f32.mrb[0].mxu0
        %v532 = vadd.f32 %v293, %v531
        %v533 = vpop.f32.mrb[0].mxu0
        %v534 = vadd.f32 %v297, %v533
        %535 = vmatprep.mubr.bf16.mxu0 0
        %536 = vmatmul.mubr.bf16.gmra.mrb[0].mxu0 %v326
        %v537 = vpop.f32.mrb[0].mxu0
        %v538 = vadd.f32 %v293, %v537
        %v539 = vpop.f32.mrb[0].mxu0
        %v540 = vadd.f32 %v297, %v539
        %v541 = vpop.f32.mrb[0].mxu0
        %v542 = vadd.f32 %v293, %v541
        %v543 = vpop.f32.mrb[0].mxu0
        %v544 = vadd.f32 %v297, %v543
        %545 = vmatprep.mubr.bf16.mxu0 0
        %546 = vmatmul.mubr.bf16.gmra.mrb[0].mxu0 %v329
        %v547 = vpop.f32.mrb[0].mxu0
        %v548 = vadd.f32 %v293, %v547
        %v549 = vpop.f32.mrb[0].mxu0
        %v550 = vadd.f32 %v297, %v549
        %v551 = vpop.f32.mrb[0].mxu0
        %v552 = vadd.f32 %v293, %v551
        %v553 = vpop.f32.mrb[0].mxu0
        %v554 = vadd.f32 %v297, %v553
        %555 = vmatprep.mubr.bf16.mxu0 0
        %556 = vmatmul.mubr.bf16.gmra.mrb[0].mxu0 %v332
        %v557 = vpop.f32.mrb[0].mxu0
        %v558 = vadd.f32 %v293, %v557
        %v559 = vpop.f32.mrb[0].mxu0
        %v560 = vadd.f32 %v297, %v559
        %v561 = vpop.f32.mrb[0].mxu0
        %v562 = vadd.f32 %v293, %v561
        %v563 = vpop.f32.mrb[0].mxu0
        %v564 = vadd.f32 %v297, %v563
        %565 = vmatprep.mubr.bf16.mxu0 0
        %566 = vmatmul.mubr.bf16.gmra.mrb[0].mxu0 %v335
        %v567 = vpop.f32.mrb[0].mxu0
        %v568 = vadd.f32 %v293, %v567
        %v569 = vpop.f32.mrb[0].mxu0
        %v570 = vadd.f32 %v297, %v569
        %v571 = vpop.f32.mrb[0].mxu0
        %v572 = vadd.f32 %v293, %v571
        %v573 = vpop.f32.mrb[0].mxu0
        %v574 = vadd.f32 %v297, %v573
        %575 = vdwg.mxu0
        %v576 = vmax.f32 %v385, 0.0
        %v577 = vmax.f32 %v387, 0.0
        %v578 = vmax.f32 %v498, 0.0
        %v579 = vmax.f32 %v500, 0.0
        %v580 = vmax.f32 %v389, 0.0
        %v581 = vmax.f32 %v391, 0.0
        %v582 = vmax.f32 %v502, 0.0
        %v583 = vmax.f32 %v504, 0.0
        %v584 = vmax.f32 %v395, 0.0
        %v585 = vmax.f32 %v397, 0.0
        %v586 = vmax.f32 %v508, 0.0
        %v587 = vmax.f32 %v510, 0.0
        %v588 = vmax.f32 %v399, 0.0
        %v589 = vmax.f32 %v401, 0.0
        %v590 = vmax.f32 %v512, 0.0
        %v591 = vmax.f32 %v514, 0.0
        %v592 = vmax.f32 %v405, 0.0
        %v593 = vmax.f32 %v407, 0.0
        %v594 = vmax.f32 %v518, 0.0
        %v595 = vmax.f32 %v520, 0.0
        %v596 = vmax.f32 %v409, 0.0
        %v597 = vmax.f32 %v411, 0.0
        %v598 = vmax.f32 %v522, 0.0
        %v599 = vmax.f32 %v524, 0.0
        %v600 = vmax.f32 %v415, 0.0
        %v601 = vmax.f32 %v417, 0.0
        %v602 = vmax.f32 %v528, 0.0
        %v603 = vmax.f32 %v530, 0.0
        %v604 = vmax.f32 %v419, 0.0
        %v605 = vmax.f32 %v421, 0.0
        %v606 = vmax.f32 %v532, 0.0
        %v607 = vmax.f32 %v534, 0.0
        %v608 = vmax.f32 %v425, 0.0
        %v609 = vmax.f32 %v427, 0.0
        %v610 = vmax.f32 %v538, 0.0
        %v611 = vmax.f32 %v540, 0.0
        %v612 = vmax.f32 %v429, 0.0
        %v613 = vmax.f32 %v431, 0.0
        %v614 = vmax.f32 %v542, 0.0
        %v615 = vmax.f32 %v544, 0.0
        %v616 = vmax.f32 %v435, 0.0
        %v617 = vmax.f32 %v437, 0.0
        %v618 = vmax.f32 %v548, 0.0
        %v619 = vmax.f32 %v550, 0.0
        %v620 = vmax.f32 %v439, 0.0
        %v621 = vmax.f32 %v441, 0.0
        %v622 = vmax.f32 %v552, 0.0
        %v623 = vmax.f32 %v554, 0.0
        %v624 = vmax.f32 %v445, 0.0
        %v625 = vmax.f32 %v447, 0.0
        %v626 = vmax.f32 %v558, 0.0
        %v627 = vmax.f32 %v560, 0.0
        %v628 = vmax.f32 %v449, 0.0
        %v629 = vmax.f32 %v451, 0.0
        %v630 = vmax.f32 %v562, 0.0
        %v631 = vmax.f32 %v564, 0.0
        %v632 = vmax.f32 %v455, 0.0
        %v633 = vmax.f32 %v457, 0.0
        %v634 = vmax.f32 %v568, 0.0
        %v635 = vmax.f32 %v570, 0.0
        %v636 = vmax.f32 %v459, 0.0
        %v637 = vmax.f32 %v461, 0.0
        %v638 = vmax.f32 %v572, 0.0
        %v639 = vmax.f32 %v574, 0.0
        %v640 = vpack.c.bf16 %v582, %v578
        %v641 = vpack.c.bf16 %v583, %v579
        %v642 = vpack.c.bf16 %v590, %v586
        %v643 = vpack.c.bf16 %v591, %v587
        %v644 = vpack.c.bf16 %v598, %v594
        %v645 = vpack.c.bf16 %v599, %v595
        %v646 = vpack.c.bf16 %v606, %v602
        %v647 = vpack.c.bf16 %v607, %v603
        %v648 = vpack.c.bf16 %v614, %v610
        %v649 = vpack.c.bf16 %v615, %v611
        %v650 = vpack.c.bf16 %v622, %v618
        %v651 = vpack.c.bf16 %v623, %v619
        %v652 = vpack.c.bf16 %v630, %v626
        %v653 = vpack.c.bf16 %v631, %v627
        %v654 = vpack.c.bf16 %v638, %v634
        %v655 = vpack.c.bf16 %v639, %v635
        %v656 = vld [vmem:[%s3] sm:$0xf]
        %v657 = vld [vmem:[%s3 + $0x4] sm:$0xf]
        %v658 = vld [vmem:[%s3 + $0x8] sm:$0xf]
        %v659 = vld [vmem:[%s3 + $0xc] sm:$0xf]
        %v660 = vld [vmem:[%s3 + $0x10] sm:$0xf]
        %v661 = vld [vmem:[%s3 + $0x14] sm:$0xf]
        %v662 = vld [vmem:[%s3 + $0x18] sm:$0xf]
        %v663 = vld [vmem:[%s3 + $0x1c] sm:$0xf]
        %v664 = vld [vmem:[%s3 + $0x20] sm:$0xf]
        %v665 = vld [vmem:[%s3 + $0x24] sm:$0xf]
        %v666 = vld [vmem:[%s3 + $0x28] sm:$0xf]
        %v667 = vld [vmem:[%s3 + $0x2c] sm:$0xf]
        %v668 = vld [vmem:[%s3 + $0x30] sm:$0xf]
        %v669 = vld [vmem:[%s3 + $0x34] sm:$0xf]
        %v670 = vld [vmem:[%s3 + $0x38] sm:$0xf]
        %v671 = vld [vmem:[%s3 + $0x3c] sm:$0xf]
        %v672 = vld [vmem:[%s3 + $0x40] sm:$0xf]
        %v673 = vld [vmem:[%s3 + $0x44] sm:$0xf]
        %v674 = vld [vmem:[%s3 + $0x48] sm:$0xf]
        %v675 = vld [vmem:[%s3 + $0x4c] sm:$0xf]
        %v676 = vld [vmem:[%s3 + $0x50] sm:$0xf]
        %v677 = vld [vmem:[%s3 + $0x54] sm:$0xf]
        %v678 = vld [vmem:[%s3 + $0x58] sm:$0xf]
        %v679 = vld [vmem:[%s3 + $0x5c] sm:$0xf]
        %v680 = vld [vmem:[%s3 + $0x60] sm:$0xf]
        %v681 = vld [vmem:[%s3 + $0x64] sm:$0xf]
        %v682 = vld [vmem:[%s3 + $0x68] sm:$0xf]
        %v683 = vld [vmem:[%s3 + $0x6c] sm:$0xf]
        %v684 = vld [vmem:[%s3 + $0x70] sm:$0xf]
        %v685 = vld [vmem:[%s3 + $0x74] sm:$0xf]
        %v686 = vld [vmem:[%s3 + $0x78] sm:$0xf]
        %v687 = vld [vmem:[%s3 + $0x7c] sm:$0xf]
        %v688 = vld [vmem:[%s5] sm:$0x3]
        %v690 = vlaneseq
        %v691 = vshrl.u32 %v690, 7
        %v692 = vsub.s32 0, %v691
        %v693 = vrot.slane %v688, %v692
        %v694 = vlaneseq
        %v695 = vshrl.u32 %v694, 7
        %v696 = vsub.s32 1, %v695
        %v697 = vrot.slane %v688, %v696
        %v700 = vmul.f32 %v576, %v693
        %v701 = vmul.f32 %v577, %v697
        %v702 = vmul.f32 %v580, %v693
        %v703 = vmul.f32 %v581, %v697
        %v704 = vmul.f32 %v584, %v693
        %v705 = vmul.f32 %v585, %v697
        %v706 = vmul.f32 %v588, %v693
        %v707 = vmul.f32 %v589, %v697
        %v708 = vmul.f32 %v592, %v693
        %v709 = vmul.f32 %v593, %v697
        %v710 = vmul.f32 %v596, %v693
        %v711 = vmul.f32 %v597, %v697
        %v712 = vmul.f32 %v600, %v693
        %v713 = vmul.f32 %v601, %v697
        %v714 = vmul.f32 %v604, %v693
        %v715 = vmul.f32 %v605, %v697
        %v716 = vmul.f32 %v608, %v693
        %v717 = vmul.f32 %v609, %v697
        %v718 = vmul.f32 %v612, %v693
        %v719 = vmul.f32 %v613, %v697
        %v720 = vmul.f32 %v616, %v693
        %v721 = vmul.f32 %v617, %v697
        %v722 = vmul.f32 %v620, %v693
        %v723 = vmul.f32 %v621, %v697
        %v724 = vmul.f32 %v624, %v693
        %v725 = vmul.f32 %v625, %v697
        %v726 = vmul.f32 %v628, %v693
        %v727 = vmul.f32 %v629, %v697
        %v728 = vmul.f32 %v632, %v693
        %v729 = vmul.f32 %v633, %v697
        %v730 = vmul.f32 %v636, %v693
        %v731 = vmul.f32 %v637, %v697
        %v732 = vadd.f32 %v700, %v701
        %733 = vadd.xlane.f32.xlu0 %v732
        %v734 = vpop.xlane.xlu0 %733
        %v735 = vadd.f32 %v702, %v703
        %736 = vadd.xlane.f32.xlu0 %v735
        %v737 = vpop.xlane.xlu0 %736
        %v738 = vadd.f32 %v704, %v705
        %739 = vadd.xlane.f32.xlu0 %v738
        %v740 = vpop.xlane.xlu0 %739
        %v741 = vadd.f32 %v706, %v707
        %742 = vadd.xlane.f32.xlu0 %v741
        %v743 = vpop.xlane.xlu0 %742
        %v744 = vadd.f32 %v708, %v709
        %745 = vadd.xlane.f32.xlu0 %v744
        %v746 = vpop.xlane.xlu0 %745
        %v747 = vadd.f32 %v710, %v711
        %748 = vadd.xlane.f32.xlu0 %v747
        %v749 = vpop.xlane.xlu0 %748
        %v750 = vadd.f32 %v712, %v713
        %751 = vadd.xlane.f32.xlu0 %v750
        %v752 = vpop.xlane.xlu0 %751
        %v753 = vadd.f32 %v714, %v715
        %754 = vadd.xlane.f32.xlu0 %v753
        %v755 = vpop.xlane.xlu0 %754
        %v756 = vadd.f32 %v716, %v717
        %757 = vadd.xlane.f32.xlu0 %v756
        %v758 = vpop.xlane.xlu0 %757
        %v759 = vadd.f32 %v718, %v719
        %760 = vadd.xlane.f32.xlu0 %v759
        %v761 = vpop.xlane.xlu0 %760
        %v762 = vadd.f32 %v720, %v721
        %763 = vadd.xlane.f32.xlu0 %v762
        %v764 = vpop.xlane.xlu0 %763
        %v765 = vadd.f32 %v722, %v723
        %766 = vadd.xlane.f32.xlu0 %v765
        %v767 = vpop.xlane.xlu0 %766
        %v768 = vadd.f32 %v724, %v725
        %769 = vadd.xlane.f32.xlu0 %v768
        %v770 = vpop.xlane.xlu0 %769
        %v771 = vadd.f32 %v726, %v727
        %772 = vadd.xlane.f32.xlu0 %v771
        %v773 = vpop.xlane.xlu0 %772
        %v774 = vadd.f32 %v728, %v729
        %775 = vadd.xlane.f32.xlu0 %v774
        %v776 = vpop.xlane.xlu0 %775
        %v777 = vadd.f32 %v730, %v731
        %778 = vadd.xlane.f32.xlu0 %v777
        %v779 = vpop.xlane.xlu0 %778
        %v780 = vld [vmem:[%s4] sm:$0x1]
        %v782 = vlaneseq
        %v783 = vshrl.u32 %v782, 7
        %v784 = vsub.s32 0, %v783
        %v785 = vrot.slane %v780, %v784
        %v819 = vunpack.c.l.b16 %v656
        %v820 = vunpack.c.l.b16 %v657
        %v821 = vunpack.c.l.b16 %v658
        %v822 = vunpack.c.l.b16 %v659
        %v823 = vunpack.c.l.b16 %v660
        %v824 = vunpack.c.l.b16 %v661
        %v825 = vunpack.c.l.b16 %v662
        %v826 = vunpack.c.l.b16 %v663
        %v827 = vunpack.c.l.b16 %v664
        %v828 = vunpack.c.l.b16 %v665
        %v829 = vunpack.c.l.b16 %v666
        %v830 = vunpack.c.l.b16 %v667
        %v831 = vunpack.c.l.b16 %v668
        %v832 = vunpack.c.l.b16 %v669
        %v833 = vunpack.c.l.b16 %v670
        %v834 = vunpack.c.l.b16 %v671
        %v835 = vunpack.c.l.b16 %v672
        %v836 = vunpack.c.l.b16 %v673
        %v837 = vunpack.c.l.b16 %v674
        %v838 = vunpack.c.l.b16 %v675
        %v839 = vunpack.c.l.b16 %v676
        %v840 = vunpack.c.l.b16 %v677
        %v841 = vunpack.c.l.b16 %v678
        %v842 = vunpack.c.l.b16 %v679
        %v843 = vunpack.c.l.b16 %v680
        %v844 = vunpack.c.l.b16 %v681
        %v845 = vunpack.c.l.b16 %v682
        %v846 = vunpack.c.l.b16 %v683
        %v847 = vunpack.c.l.b16 %v684
        %v848 = vunpack.c.l.b16 %v685
        %v849 = vunpack.c.l.b16 %v686
        %v850 = vunpack.c.l.b16 %v687
        %v851 = vpack.c.b16 %v820, %v819
        %v852 = vpack.c.b16 %v822, %v821
        %v853 = vpack.c.b16 %v824, %v823
        %v854 = vpack.c.b16 %v826, %v825
        %v855 = vpack.c.b16 %v828, %v827
        %v856 = vpack.c.b16 %v830, %v829
        %v857 = vpack.c.b16 %v832, %v831
        %v858 = vpack.c.b16 %v834, %v833
        %v859 = vpack.c.b16 %v836, %v835
        %v860 = vpack.c.b16 %v838, %v837
        %v861 = vpack.c.b16 %v840, %v839
        %v862 = vpack.c.b16 %v842, %v841
        %v863 = vpack.c.b16 %v844, %v843
        %v864 = vpack.c.b16 %v846, %v845
        %v865 = vpack.c.b16 %v848, %v847
        %v866 = vpack.c.b16 %v850, %v849
        %883 = vmatprep.subr.bf16.mxu0 0
        %884 = vmatpush1.bf16.msra.mxu0 %v851
        %885 = vmatprep.subr.bf16.mxu0 0
        %886 = vmatpush1.bf16.msra.mxu0 %v852
        %887 = vmatprep.subr.bf16.mxu0 0
        %888 = vmatpush1.bf16.msra.mxu0 %v853
        %889 = vmatprep.subr.bf16.mxu0 0
        %890 = vmatpush1.bf16.msra.mxu0 %v854
        %891 = vmatprep.subr.bf16.mxu0 0
        %892 = vmatpush1.bf16.msra.mxu0 %v855
        %893 = vmatprep.subr.bf16.mxu0 0
        %894 = vmatpush1.bf16.msra.mxu0 %v856
        %895 = vmatprep.subr.bf16.mxu0 0
        %896 = vmatpush1.bf16.msra.mxu0 %v857
        %897 = vmatprep.subr.bf16.mxu0 0
        %898 = vmatpush1.bf16.msra.mxu0 %v858
        %899 = vmatprep.subr.bf16.mxu0 0
        %900 = vmatpush1.bf16.msra.mxu0 %v859
        %901 = vmatprep.subr.bf16.mxu0 0
        %902 = vmatpush1.bf16.msra.mxu0 %v860
        %903 = vmatprep.subr.bf16.mxu0 0
        %904 = vmatpush1.bf16.msra.mxu0 %v861
        %905 = vmatprep.subr.bf16.mxu0 0
        %906 = vmatpush1.bf16.msra.mxu0 %v862
        %907 = vmatprep.subr.bf16.mxu0 0
        %908 = vmatpush1.bf16.msra.mxu0 %v863
        %909 = vmatprep.subr.bf16.mxu0 0
        %910 = vmatpush1.bf16.msra.mxu0 %v864
        %911 = vmatprep.subr.bf16.mxu0 0
        %912 = vmatpush1.bf16.msra.mxu0 %v865
        %913 = vmatprep.subr.bf16.mxu0 0
        %914 = vmatpush1.bf16.msra.mxu0 %v866
        %915 = vmatprep.mubr.bf16.mxu0 %v641
        %916 = vmatmul.mubr.bf16.gmra.mrb[0].mxu0 %v640
        %v917 = vpop.f32.mrb[0].mxu0
        %v918 = vadd.f32 %v785, %v917
        %v919 = vpop.f32.mrb[0].mxu0
        %v920 = vpop.f32.mrb[0].mxu0
        %v921 = vadd.f32 %v785, %v920
        %v922 = vpop.f32.mrb[0].mxu0
        %923 = vmatprep.mubr.bf16.mxu0 %v643
        %924 = vmatmul.mubr.bf16.gmra.mrb[0].mxu0 %v642
        %v925 = vpop.f32.mrb[0].mxu0
        %v926 = vadd.f32 %v785, %v925
        %v927 = vpop.f32.mrb[0].mxu0
        %v928 = vpop.f32.mrb[0].mxu0
        %v929 = vadd.f32 %v785, %v928
        %v930 = vpop.f32.mrb[0].mxu0
        %931 = vmatprep.mubr.bf16.mxu0 %v645
        %932 = vmatmul.mubr.bf16.gmra.mrb[0].mxu0 %v644
        %v933 = vpop.f32.mrb[0].mxu0
        %v934 = vadd.f32 %v785, %v933
        %v935 = vpop.f32.mrb[0].mxu0
        %v936 = vpop.f32.mrb[0].mxu0
        %v937 = vadd.f32 %v785, %v936
        %v938 = vpop.f32.mrb[0].mxu0
        %939 = vmatprep.mubr.bf16.mxu0 %v647
        %940 = vmatmul.mubr.bf16.gmra.mrb[0].mxu0 %v646
        %v941 = vpop.f32.mrb[0].mxu0
        %v942 = vadd.f32 %v785, %v941
        %v943 = vpop.f32.mrb[0].mxu0
        %v944 = vpop.f32.mrb[0].mxu0
        %v945 = vadd.f32 %v785, %v944
        %v946 = vpop.f32.mrb[0].mxu0
        %947 = vmatprep.mubr.bf16.mxu0 %v649
        %948 = vmatmul.mubr.bf16.gmra.mrb[0].mxu0 %v648
        %v949 = vpop.f32.mrb[0].mxu0
        %v950 = vadd.f32 %v785, %v949
        %v951 = vpop.f32.mrb[0].mxu0
        %v952 = vpop.f32.mrb[0].mxu0
        %v953 = vadd.f32 %v785, %v952
        %v954 = vpop.f32.mrb[0].mxu0
        %955 = vmatprep.mubr.bf16.mxu0 %v651
        %956 = vmatmul.mubr.bf16.gmra.mrb[0].mxu0 %v650
        %v957 = vpop.f32.mrb[0].mxu0
        %v958 = vadd.f32 %v785, %v957
        %v959 = vpop.f32.mrb[0].mxu0
        %v960 = vpop.f32.mrb[0].mxu0
        %v961 = vadd.f32 %v785, %v960
        %v962 = vpop.f32.mrb[0].mxu0
        %963 = vmatprep.mubr.bf16.mxu0 %v653
        %964 = vmatmul.mubr.bf16.gmra.mrb[0].mxu0 %v652
        %v965 = vpop.f32.mrb[0].mxu0
        %v966 = vadd.f32 %v785, %v965
        %v967 = vpop.f32.mrb[0].mxu0
        %v968 = vpop.f32.mrb[0].mxu0
        %v969 = vadd.f32 %v785, %v968
        %v970 = vpop.f32.mrb[0].mxu0
        %971 = vmatprep.mubr.bf16.mxu0 %v655
        %972 = vmatmul.mubr.bf16.gmra.mrb[0].mxu0 %v654
        %v973 = vpop.f32.mrb[0].mxu0
        %v974 = vadd.f32 %v785, %v973
        %v975 = vpop.f32.mrb[0].mxu0
        %v976 = vpop.f32.mrb[0].mxu0
        %v977 = vadd.f32 %v785, %v976
        %v978 = vpop.f32.mrb[0].mxu0
        %979 = vdwg.mxu0
        %v980 = vlaneseq
        %v981 = vand.u32 %v980, 127
        %vm982 = vcmp.eq.s32.totalorder %v981, 4
        %v983 = vsel %vm982, -1e+30, %v918
        %v984 = vsel %vm982, -1e+30, %v921
        %v985 = vsel %vm982, -1e+30, %v926
        %v986 = vsel %vm982, -1e+30, %v929
        %v987 = vsel %vm982, -1e+30, %v934
        %v988 = vsel %vm982, -1e+30, %v937
        %v989 = vsel %vm982, -1e+30, %v942
        %v990 = vsel %vm982, -1e+30, %v945
        %v991 = vsel %vm982, -1e+30, %v950
        %v992 = vsel %vm982, -1e+30, %v953
        %v993 = vsel %vm982, -1e+30, %v958
        %v994 = vsel %vm982, -1e+30, %v961
        %v995 = vsel %vm982, -1e+30, %v966
        %v996 = vsel %vm982, -1e+30, %v969
        %v997 = vsel %vm982, -1e+30, %v974
        %v998 = vsel %vm982, -1e+30, %v977
        %999 = vmax.xlane.f32.xlu0 %v983
        %v1000 = vpop.xlane.xlu0 %999
        %1001 = vmax.xlane.f32.xlu0 %v984
        %v1002 = vpop.xlane.xlu0 %1001
        %1003 = vmax.xlane.f32.xlu0 %v985
        %v1004 = vpop.xlane.xlu0 %1003
        %1005 = vmax.xlane.f32.xlu0 %v986
        %v1006 = vpop.xlane.xlu0 %1005
        %1007 = vmax.xlane.f32.xlu0 %v987
        %v1008 = vpop.xlane.xlu0 %1007
        %1009 = vmax.xlane.f32.xlu0 %v988
        %v1010 = vpop.xlane.xlu0 %1009
        %1011 = vmax.xlane.f32.xlu0 %v989
        %v1012 = vpop.xlane.xlu0 %1011
        %1013 = vmax.xlane.f32.xlu0 %v990
        %v1014 = vpop.xlane.xlu0 %1013
        %1015 = vmax.xlane.f32.xlu0 %v991
        %v1016 = vpop.xlane.xlu0 %1015
        %1017 = vmax.xlane.f32.xlu0 %v992
        %v1018 = vpop.xlane.xlu0 %1017
        %1019 = vmax.xlane.f32.xlu0 %v993
        %v1020 = vpop.xlane.xlu0 %1019
        %1021 = vmax.xlane.f32.xlu0 %v994
        %v1022 = vpop.xlane.xlu0 %1021
        %1023 = vmax.xlane.f32.xlu0 %v995
        %v1024 = vpop.xlane.xlu0 %1023
        %1025 = vmax.xlane.f32.xlu0 %v996
        %v1026 = vpop.xlane.xlu0 %1025
        %1027 = vmax.xlane.f32.xlu0 %v997
        %v1028 = vpop.xlane.xlu0 %1027
        %1029 = vmax.xlane.f32.xlu0 %v998
        %v1030 = vpop.xlane.xlu0 %1029
        %v1031 = vsub.f32 %v983, %v1000
        %v1032 = vsub.f32 %v984, %v1002
        %v1033 = vsub.f32 %v985, %v1004
        %v1034 = vsub.f32 %v986, %v1006
        %v1035 = vsub.f32 %v987, %v1008
        %v1036 = vsub.f32 %v988, %v1010
        %v1037 = vsub.f32 %v989, %v1012
        %v1038 = vsub.f32 %v990, %v1014
        %v1039 = vsub.f32 %v991, %v1016
        %v1040 = vsub.f32 %v992, %v1018
        %v1041 = vsub.f32 %v993, %v1020
        %v1042 = vsub.f32 %v994, %v1022
        %v1043 = vsub.f32 %v995, %v1024
        %v1044 = vsub.f32 %v996, %v1026
        %v1045 = vsub.f32 %v997, %v1028
        %v1046 = vsub.f32 %v998, %v1030
        %v1047 = vmul.f32 %v1031, 1.442695
        %v1048 = vpow.pop %v1047
        %v1049 = vmul.f32 %v1032, 1.442695
        %v1050 = vpow.pop %v1049
        %v1051 = vmul.f32 %v1033, 1.442695
        %v1052 = vpow.pop %v1051
        %v1053 = vmul.f32 %v1034, 1.442695
        %v1054 = vpow.pop %v1053
        %v1055 = vmul.f32 %v1035, 1.442695
        %v1056 = vpow.pop %v1055
        %v1057 = vmul.f32 %v1036, 1.442695
        %v1058 = vpow.pop %v1057
        %v1059 = vmul.f32 %v1037, 1.442695
        %v1060 = vpow.pop %v1059
        %v1061 = vmul.f32 %v1038, 1.442695
        %v1062 = vpow.pop %v1061
        %v1063 = vmul.f32 %v1039, 1.442695
        %v1064 = vpow.pop %v1063
        %v1065 = vmul.f32 %v1040, 1.442695
        %v1066 = vpow.pop %v1065
        %v1067 = vmul.f32 %v1041, 1.442695
        %v1068 = vpow.pop %v1067
        %v1069 = vmul.f32 %v1042, 1.442695
        %v1070 = vpow.pop %v1069
        %v1071 = vmul.f32 %v1043, 1.442695
        %v1072 = vpow.pop %v1071
        %v1073 = vmul.f32 %v1044, 1.442695
        %v1074 = vpow.pop %v1073
        %v1075 = vmul.f32 %v1045, 1.442695
        %v1076 = vpow.pop %v1075
        %v1077 = vmul.f32 %v1046, 1.442695
        %v1078 = vpow.pop %v1077
        %1079 = vadd.xlane.f32.xlu0 %v1048
        %v1080 = vpop.xlane.xlu0 %1079
        %1081 = vadd.xlane.f32.xlu0 %v1050
        %v1082 = vpop.xlane.xlu0 %1081
        %1083 = vadd.xlane.f32.xlu0 %v1052
        %v1084 = vpop.xlane.xlu0 %1083
        %1085 = vadd.xlane.f32.xlu0 %v1054
        %v1086 = vpop.xlane.xlu0 %1085
        %1087 = vadd.xlane.f32.xlu0 %v1056
        %v1088 = vpop.xlane.xlu0 %1087
        %1089 = vadd.xlane.f32.xlu0 %v1058
        %v1090 = vpop.xlane.xlu0 %1089
        %1091 = vadd.xlane.f32.xlu0 %v1060
        %v1092 = vpop.xlane.xlu0 %1091
        %1093 = vadd.xlane.f32.xlu0 %v1062
        %v1094 = vpop.xlane.xlu0 %1093
        %1095 = vadd.xlane.f32.xlu0 %v1064
        %v1096 = vpop.xlane.xlu0 %1095
        %1097 = vadd.xlane.f32.xlu0 %v1066
        %v1098 = vpop.xlane.xlu0 %1097
        %1099 = vadd.xlane.f32.xlu0 %v1068
        %v1100 = vpop.xlane.xlu0 %1099
        %1101 = vadd.xlane.f32.xlu0 %v1070
        %v1102 = vpop.xlane.xlu0 %1101
        %1103 = vadd.xlane.f32.xlu0 %v1072
        %v1104 = vpop.xlane.xlu0 %1103
        %1105 = vadd.xlane.f32.xlu0 %v1074
        %v1106 = vpop.xlane.xlu0 %1105
        %1107 = vadd.xlane.f32.xlu0 %v1076
        %v1108 = vpop.xlane.xlu0 %1107
        %1109 = vadd.xlane.f32.xlu0 %v1078
        %v1110 = vpop.xlane.xlu0 %1109
        %v1111 = vrcp.pop %v1080
        %v1112 = vrcp.pop %v1082
        %v1113 = vrcp.pop %v1084
        %v1114 = vrcp.pop %v1086
        %v1115 = vrcp.pop %v1088
        %v1116 = vrcp.pop %v1090
        %v1117 = vrcp.pop %v1092
        %v1118 = vrcp.pop %v1094
        %v1119 = vrcp.pop %v1096
        %v1120 = vrcp.pop %v1098
        %v1121 = vrcp.pop %v1100
        %v1122 = vrcp.pop %v1102
        %v1123 = vrcp.pop %v1104
        %v1124 = vrcp.pop %v1106
        %v1125 = vrcp.pop %v1108
        %v1126 = vrcp.pop %v1110
        %v1127 = vmul.f32 %v1048, %v1111
        %v1128 = vmul.f32 %v1050, %v1112
        %v1129 = vmul.f32 %v1052, %v1113
        %v1130 = vmul.f32 %v1054, %v1114
        %v1131 = vmul.f32 %v1056, %v1115
        %v1132 = vmul.f32 %v1058, %v1116
        %v1133 = vmul.f32 %v1060, %v1117
        %v1134 = vmul.f32 %v1062, %v1118
        %v1135 = vmul.f32 %v1064, %v1119
        %v1136 = vmul.f32 %v1066, %v1120
        %v1137 = vmul.f32 %v1068, %v1121
        %v1138 = vmul.f32 %v1070, %v1122
        %v1139 = vmul.f32 %v1072, %v1123
        %v1140 = vmul.f32 %v1074, %v1124
        %v1141 = vmul.f32 %v1076, %v1125
        %v1142 = vmul.f32 %v1078, %v1126
        %v1143 = vadd.f32 %v734, %v918
        %v1144 = vadd.f32 %v737, %v921
        %v1145 = vadd.f32 %v740, %v926
        %v1146 = vadd.f32 %v743, %v929
        %v1147 = vadd.f32 %v746, %v934
        %v1148 = vadd.f32 %v749, %v937
        %v1149 = vadd.f32 %v752, %v942
        %v1150 = vadd.f32 %v755, %v945
        %v1151 = vadd.f32 %v758, %v950
        %v1152 = vadd.f32 %v761, %v953
        %v1153 = vadd.f32 %v764, %v958
        %v1154 = vadd.f32 %v767, %v961
        %v1155 = vadd.f32 %v770, %v966
        %v1156 = vadd.f32 %v773, %v969
        %v1157 = vadd.f32 %v776, %v974
        %v1158 = vadd.f32 %v779, %v977
        %v1159 = vsel %vm982, %v1143, %v1127
        %v1160 = vsel %vm982, %v1144, %v1128
        %v1161 = vsel %vm982, %v1145, %v1129
        %v1162 = vsel %vm982, %v1146, %v1130
        %v1163 = vsel %vm982, %v1147, %v1131
        %v1164 = vsel %vm982, %v1148, %v1132
        %v1165 = vsel %vm982, %v1149, %v1133
        %v1166 = vsel %vm982, %v1150, %v1134
        %v1167 = vsel %vm982, %v1151, %v1135
        %v1168 = vsel %vm982, %v1152, %v1136
        %v1169 = vsel %vm982, %v1153, %v1137
        %v1170 = vsel %vm982, %v1154, %v1138
        %v1171 = vsel %vm982, %v1155, %v1139
        %v1172 = vsel %vm982, %v1156, %v1140
        %v1173 = vsel %vm982, %v1157, %v1141
        %v1174 = vsel %vm982, %v1158, %v1142
        %1175 = vst [vmem:[%s245] sm:$0xff] %v1159
        %1176 = vst [vmem:[%s245 + $0x8] sm:$0xff] %v1160
        %1177 = vst [vmem:[%s245 + $0x10] sm:$0xff] %v1161
        %1178 = vst [vmem:[%s245 + $0x18] sm:$0xff] %v1162
        %1179 = vst [vmem:[%s245 + $0x20] sm:$0xff] %v1163
        %1180 = vst [vmem:[%s245 + $0x28] sm:$0xff] %v1164
        %1181 = vst [vmem:[%s245 + $0x30] sm:$0xff] %v1165
        %1182 = vst [vmem:[%s245 + $0x38] sm:$0xff] %v1166
        %1183 = vst [vmem:[%s245 + $0x40] sm:$0xff] %v1167
        %1184 = vst [vmem:[%s245 + $0x48] sm:$0xff] %v1168
        %1185 = vst [vmem:[%s245 + $0x50] sm:$0xff] %v1169
        %1186 = vst [vmem:[%s245 + $0x58] sm:$0xff] %v1170
        %1187 = vst [vmem:[%s245 + $0x60] sm:$0xff] %v1171
        %1188 = vst [vmem:[%s245 + $0x68] sm:$0xff] %v1172
        %1189 = vst [vmem:[%s245 + $0x70] sm:$0xff] %v1173
        %1190 = vst [vmem:[%s245 + $0x78] sm:$0xff] %v1174
        %s1191 = sand.u32 %s159, 1
        %s1192 = scalar_lea.sflag [#allocation3], %s1191
        %s1193 = sand.u32 %s159, 1
        %s1194 = smul.addr %s1193, 128
        %s1195 = scalar_lea.vmem [#allocation2], %s1194
        // Predicated region
        $region45: #{tpu_custom_call.1} parent=43 // pred_check
          %p1196 = pneg %p169
        $region46: #{tpu_custom_call.1} parent=43 // pred_check_branch
          %1198 = sbr.rel (%p1196) target = $region48
        $region47: #{tpu_custom_call.1} parent=43 // pred_region
          %s1199 = smul.u32 16, %s20
          %s1201 = ssub.s32 2048, 2048
          %1202 = vsyncadd %s1192, %s1201
          %s1203 = smul.addr %s1199, 128
          %s1204 = scalar_lea.hbm %s6, %s1203
          %s1205 = sshll.u32 %s1195, 4
          %s1206 = int_to_ptr.vmem [resolvable:$true] %s1205
          %1211 = dma.vmem_to_hbm [thread:$0]  %s1206, 2048, %s1204, %s1192, 128, 128, 8
        $region48: #{tpu_custom_call.1} parent=43 // pred_fallthru
          _
      $region44: #{tpu_custom_call.1} parent=5 // pred_fallthru
        _
      %p1212 = scmp.le.s32.totalorder 2, %s15
      // Predicated region
      $region49: #{tpu_custom_call.1} parent=5 // pred_check
        %p1213 = pneg %p1212
      $region50: #{tpu_custom_call.1} parent=5 // pred_check_branch
        %1215 = sbr.rel (%p1213) target = $region52
      $region51: #{tpu_custom_call.1} parent=5 // pred_region
        %s1216 = ssub.s32 %s15, 2
        // Predicated region
        $region53: #{tpu_custom_call.1} parent=51 // pred_check
          %p1217 = pneg %p175
        $region54: #{tpu_custom_call.1} parent=51 // pred_check_branch
          %1219 = sbr.rel (%p1217) target = $region56
        $region55: #{tpu_custom_call.1} parent=51 // pred_region
          %s1220 = sand.u32 %s160, 1
          %s1221 = scalar_lea.sflag [#allocation3], %s1220
          %s1222 = sand.u32 %s160, 1
          %s1223 = smul.addr %s1222, 128
          %s1224 = scalar_lea.vmem [#allocation2], %s1223
          %1225 = dma.done %s1221, 2048
        $region56: #{tpu_custom_call.1} parent=51 // pred_fallthru
          _
      $region52: #{tpu_custom_call.1} parent=5 // pred_fallthru
        _
    $region6: #{tpu_custom_call.1} parent=1 // loop_footer
      %s19 = sadd.s32 1, %s15
    $region7: #{tpu_custom_call.1} parent=1 // loop_footer_branch
      %14 = sbr.rel target = $region3
    $region8: #{tpu_custom_call.1} parent=1 // loop_exit
      _
    %1226 = vsyncpa [#allocation3], 1
    %s1227 = scalar_lea.sflag [#allocation3], 1
    %1228 = vsyncpa %s1227, 1

</llo_original>
